<compile_context>
chip_gen: v7x
topology: tpu7x:2x2x1
jax: 0.10.0
libtpu: 0.0.40
codegen_flags: <defaults>
</compile_context>

<pallas_src>
import jax
import jax.numpy as jnp
import numpy as np
from jax.experimental import pallas as pl
from jax.experimental.pallas import tpu as pltpu


def _fourier_kernel(x_ref, exp_ref, out_ref):
    """One batch tile: out = [x | sin(x_proj) | cos(x_proj)] in one wide store.

    x_ref   : (TB, d)             float32
    exp_ref : (1, p)              float32 (frequencies, lane-dense row)
    out_ref : (TB, d + 2*d*p)     float32
    """
    x = x_ref[...]            # (TB, d)
    e = exp_ref[...]          # (1, p)
    d = x.shape[1]

    # x_proj[:, j*p + k] = x[:, j] * exp[k]; each product is a single exact f32
    # VPU multiply (bit-identical to einsum('bd,p->bdp')), assembled lane-dense
    # so sin/cos and the final store run on wide tiles.
    proj = jnp.concatenate([x[:, j:j + 1] * e for j in range(d)], axis=1)  # (TB, d*p)

    out_ref[...] = jnp.concatenate(
        [x, jnp.sin(proj), jnp.cos(proj)], axis=1).astype(out_ref.dtype)


def fourier_features(x: jax.Array, exp: jax.Array, *, block_rows: int = 4096) -> jax.Array:
    """Pallas FourierFeatures forward. x: (b, d), exp: (p,). Returns (b, d + 2*d*p)."""
    b, d = x.shape
    p = exp.shape[0]
    out_w = d + 2 * d * p

    # Batch tile: whole batch when it fits (single block, block dim == array dim
    # is always layout-legal); otherwise a multiple-of-8 tile, with Pallas
    # handling the partial boundary block of a non-divisible batch.
    if b <= block_rows:
        tb = b
    else:
        tb = block_rows - (block_rows % 8) or 8
    grid = (pl.cdiv(b, tb),)

    return pl.pallas_call(
        _fourier_kernel,
        out_shape=jax.ShapeDtypeStruct((b, out_w), x.dtype),
        grid_spec=pltpu.PrefetchScalarGridSpec(
            num_scalar_prefetch=0,
            grid=grid,
            in_specs=[
                pl.BlockSpec((tb, d), lambda i: (i, 0)),   # x tile
                pl.BlockSpec((1, p), lambda i: (0, 0)),    # exp, resident
            ],
            out_specs=pl.BlockSpec((tb, out_w), lambda i: (i, 0)),
        ),
        compiler_params=pltpu.CompilerParams(
            dimension_semantics=("parallel",)),
    )(x, exp.astype(x.dtype).reshape(1, p))


def fourier_features_batched(x: jax.Array, exp: jax.Array, *, block_rows: int = 4096) -> jax.Array:
    """forward_batched: x (b, n, d) -> (b, n, d + 2*d*p)."""
    b, n, d = x.shape
    out = fourier_features(x.reshape(b * n, d), exp, block_rows=block_rows)
    return out.reshape(b, n, -1)


def fourier_features_ref(x: jax.Array, exp: jax.Array) -> jax.Array:
    """Pure-JAX reference mirroring the PyTorch forward()."""
    b, d = x.shape
    p = exp.shape[0]
    x_proj = jnp.einsum('bd,p->bdp', x, exp).reshape(b, d * p)
    return jnp.concatenate([x, jnp.sin(x_proj), jnp.cos(x_proj)], axis=-1)


if __name__ == "__main__":
    # Parameter init exactly as in the module __init__:
    #   exp = 2 ** arange(0, mapping_size) * pi
    mapping_size = 16
    exp = (2.0 ** jnp.arange(0, mapping_size, dtype=jnp.float32)) * np.pi

    # Primary check: forward(x: (b, d)), single-block path.
    b, d = 8, 4
    x = jax.random.normal(jax.random.PRNGKey(0), (b, d), dtype=jnp.float32)
    out = jax.block_until_ready(fourier_features(x, exp))
    ref = fourier_features_ref(x, exp)
    assert out.shape == (b, d + 2 * d * mapping_size), out.shape
    np.testing.assert_allclose(np.asarray(out), np.asarray(ref),
                               rtol=1e-5, atol=1e-5)

    # Secondary check: batch not divisible by the tile -> multi-step parallel
    # grid with a partial boundary block (137 rows, 64-row tiles -> 3 steps).
    b2, d2 = 137, 3
    x2 = jax.random.normal(jax.random.PRNGKey(1), (b2, d2), dtype=jnp.float32)
    out2 = jax.block_until_ready(fourier_features(x2, exp, block_rows=64))
    ref2 = fourier_features_ref(x2, exp)
    assert out2.shape == (b2, d2 + 2 * d2 * mapping_size), out2.shape
    # Looser tolerance: sin/cos at frequencies up to 2^15*pi are range-reduction
    # limited, so Mosaic vs XLA transcendental implementations can differ > 1e-5.
    np.testing.assert_allclose(np.asarray(out2), np.asarray(ref2),
                               rtol=1e-4, atol=1e-4)

    # forward_batched check: (b, n, d) == forward on flattened rows.
    xb = jax.random.normal(jax.random.PRNGKey(2), (2, 9, 3), dtype=jnp.float32)
    outb = jax.block_until_ready(fourier_features_batched(xb, exp))
    refb = fourier_features_ref(xb.reshape(-1, 3), exp).reshape(2, 9, -1)
    assert outb.shape == (2, 9, 3 + 2 * 3 * mapping_size), outb.shape
    np.testing.assert_allclose(np.asarray(outb), np.asarray(refb),
                               rtol=1e-4, atol=1e-4)

    print("KERNEL_OK")
</pallas_src>

<mosaic_0001>
module attributes {stable_mosaic.version = 11 : i64} {
  func.func @_fourier_kernel(%arg0: i32, %arg1: memref<8x4xf32, #tpu.memory_space<vmem>>, %arg2: memref<1x16xf32, #tpu.memory_space<vmem>>, %arg3: memref<8x132xf32, #tpu.memory_space<vmem>>) attributes {dimension_semantics = [#tpu.dimension_semantics<parallel>], iteration_bounds = array<i64: 1>, scalar_prefetch = 0 : i64, scratch_operands = 0 : i64, tpu.core_type = #tpu.core_type<tc>, window_params = [{transform_indices = @transform_0, window_bounds = array<i64: 8, 4>}, {pipeline_mode = #tpu.pipeline_mode<synchronous>, transform_indices = @transform_1, window_bounds = array<i64: 1, 16>}, {transform_indices = @transform_2, window_bounds = array<i64: 8, 132>}]} {
    %c0 = arith.constant 0 : index
    %c0_0 = arith.constant 0 : index
    %0 = vector.load %arg1[%c0, %c0_0] : memref<8x4xf32, #tpu.memory_space<vmem>>, vector<8x4xf32>
    %c0_1 = arith.constant 0 : index
    %c0_2 = arith.constant 0 : index
    %1 = vector.load %arg2[%c0_1, %c0_2] : memref<1x16xf32, #tpu.memory_space<vmem>>, vector<1x16xf32>
    %2 = vector.extract_strided_slice %0 {offsets = [0, 0], sizes = [8, 1], strides = [1, 1]} : vector<8x4xf32> to vector<8x1xf32>
    %3 = vector.broadcast %2 : vector<8x1xf32> to vector<8x16xf32>
    %4 = vector.broadcast %1 : vector<1x16xf32> to vector<8x16xf32>
    %5 = arith.mulf %3, %4 : vector<8x16xf32>
    %6 = vector.extract_strided_slice %0 {offsets = [0, 1], sizes = [8, 1], strides = [1, 1]} : vector<8x4xf32> to vector<8x1xf32>
    %7 = vector.broadcast %6 : vector<8x1xf32> to vector<8x16xf32>
    %8 = vector.broadcast %1 : vector<1x16xf32> to vector<8x16xf32>
    %9 = arith.mulf %7, %8 : vector<8x16xf32>
    %10 = vector.extract_strided_slice %0 {offsets = [0, 2], sizes = [8, 1], strides = [1, 1]} : vector<8x4xf32> to vector<8x1xf32>
    %11 = vector.broadcast %10 : vector<8x1xf32> to vector<8x16xf32>
    %12 = vector.broadcast %1 : vector<1x16xf32> to vector<8x16xf32>
    %13 = arith.mulf %11, %12 : vector<8x16xf32>
    %14 = vector.extract_strided_slice %0 {offsets = [0, 3], sizes = [8, 1], strides = [1, 1]} : vector<8x4xf32> to vector<8x1xf32>
    %15 = vector.broadcast %14 : vector<8x1xf32> to vector<8x16xf32>
    %16 = vector.broadcast %1 : vector<1x16xf32> to vector<8x16xf32>
    %17 = arith.mulf %15, %16 : vector<8x16xf32>
    %18 = tpu.concatenate %5, %9, %13, %17 in 1 : vector<8x16xf32>, vector<8x16xf32>, vector<8x16xf32>, vector<8x16xf32> -> vector<8x64xf32>
    %19 = math.sin %18 : vector<8x64xf32>
    %20 = math.cos %18 : vector<8x64xf32>
    %21 = tpu.concatenate %0, %19, %20 in 1 : vector<8x4xf32>, vector<8x64xf32>, vector<8x64xf32> -> vector<8x132xf32>
    %c0_3 = arith.constant 0 : index
    %c0_4 = arith.constant 0 : index
    %22 = vector.load %arg3[%c0_3, %c0_4] : memref<8x132xf32, #tpu.memory_space<vmem>>, vector<8x132xf32>
    tpu.vector_store %arg3[%c0_3, %c0_4], %21 {strides = array<i32>} : memref<8x132xf32, #tpu.memory_space<vmem>>, vector<8x132xf32>,
    return
  }
  func.func @transform_0(%arg0: i32) -> (i32, i32) {
    %c0_i32 = arith.constant 0 : i32
    %c0_i32_0 = arith.constant 0 : i32
    return %arg0, %c0_i32 : i32, i32
  }
  func.func @transform_1(%arg0: i32) -> (i32, i32) {
    %c0_i32 = arith.constant 0 : i32
    %c0_i32_0 = arith.constant 0 : i32
    %c0_i32_1 = arith.constant 0 : i32
    return %c0_i32, %c0_i32_0 : i32, i32
  }
  func.func @transform_2(%arg0: i32) -> (i32, i32) {
    %c0_i32 = arith.constant 0 : i32
    %c0_i32_0 = arith.constant 0 : i32
    return %arg0, %c0_i32 : i32, i32
  }
}

</mosaic_0001>

<llo_original>
// kernel: tpu_custom_call.1
$region0: #{tpu_custom_call.1}
  #allocation0 [shape = 'u32[]', space=smem, size = 0x4, offset = 0x4, fixed_abs, tag = 'smem constant byte address 0x4 - core index']
  #allocation1 [shape = 'u32[144,128]{1,0:T(1,128)}', space=vmem, size = 0x12000, scoped, tag = 'internal scratch']
  %s0 = inlined_call_operand.vmem [shape: f32[8,4], index: 0, kind: input, shape index: {}]
  %s1 = inlined_call_operand.vmem [shape: f32[1,16], index: 1, kind: input, shape index: {}]
  %s2 = inlined_call_operand.hbm [shape: f32[8,132], index: 2, kind: output, shape index: {}]
  %s3 = sld [smem:[#allocation0]]
  $region18: #{tpu_custom_call.1} parent=0
    _
  %s5 = ssub.s32 1, %s3
  %s6 = scalar_select 0, %s5, %s3
  $region1: #{tpu_custom_call.1} parent=0
    #allocation2 [shape = 'u8[8192]{0}', space=vmem, size = 0x2000, scoped, tag = 'output window, operand 0, single buffered']
    #allocation3 [shape = 's32[1]{0}', space=sflag, size = 0x4, scoped, tag = 'scoped memory for tpu_custom_call.1']
    %7 = vsyncpa [#allocation3], 0
    // Predicated region
    $region2: #{tpu_custom_call.1} parent=1 // pred_check
      _
    $region3: #{tpu_custom_call.1} parent=1 // pred_check_branch
      %9 = sbr.rel (0) target = $region5
    $region4: #{tpu_custom_call.1} parent=1 // pred_region
      _
    $region5: #{tpu_custom_call.1} parent=1 // pred_fallthru
      _
    // Predicated region
    $region6: #{tpu_custom_call.1} parent=1 // pred_check
      _
    $region7: #{tpu_custom_call.1} parent=1 // pred_check_branch
      %11 = sbr.rel (0) target = $region9
    $region8: #{tpu_custom_call.1} parent=1 // pred_region
      _
    $region9: #{tpu_custom_call.1} parent=1 // pred_fallthru
      _
    %v12 = vld [vmem:[%s0] sm:$0xff]
    %v13 = vld [vmem:[%s1] sm:$0x1]
    %15 = vset.pattern.permute.xlu0 0
    %16 = vperm.xlu0 %15, %v12
    %v17 = vpop.permute.xlu0 %16
    %v20 = vlaneseq
    %v21 = vshrl.u32 %v20, 7
    %v22 = vsub.s32 0, %v21
    %v23 = vrot.slane %v13, %v22
    %v25 = vmul.f32 %v17, %v23
    %26 = vset.pattern.permute.xlu0 1
    %27 = vperm.xlu0 %26, %v12
    %v28 = vpop.permute.xlu0 %27
    %v30 = vmul.f32 %v28, %v23
    %31 = vset.pattern.permute.xlu0 2
    %32 = vperm.xlu0 %31, %v12
    %v33 = vpop.permute.xlu0 %32
    %v35 = vmul.f32 %v33, %v23
    %36 = vset.pattern.permute.xlu0 3
    %37 = vperm.xlu0 %36, %v12
    %v38 = vpop.permute.xlu0 %37
    %v40 = vmul.f32 %v38, %v23
    %42 = vrot.lane.b32.xlu0 %v30, 16
    %v43 = vpop.permute.xlu0 %42
    %46 = vrot.lane.b32.xlu0 %v35, 32
    %v47 = vpop.permute.xlu0 %46
    %50 = vrot.lane.b32.xlu0 %v40, 48
    %v51 = vpop.permute.xlu0 %50
    %vm53 = vcmask 130048
    %v54 = vsel %vm53, %v25, %v43
    %vm55 = vcmask 261120
    %v56 = vsel %vm55, %v54, %v47
    %vm57 = vcmask 392192
    %v58 = vsel %vm57, %v56, %v51
    %v59 = vand.u32 2147483647, %v58
    %vm60 = vcmp.le.f32.partialorder %v59, 0.7853982
    %vm61 = vcmp.lt.s32.totalorder %v58, 0
    %v62 = vand.u32 %v58, 2139095040
    %v63 = vshrl.u32 %v62, 23
    %v64 = vsub.s32 %v63, 127
    %v65 = vand.u32 2147483647, %v58
    %v66 = vand.u32 %v65, 8388607
    %v67 = vor.u32 %v66, 8388608
    %v68 = vsub.s32 0, %v67
    %v69 = vadd.s32 %v64, 1
    %vm70 = vcmp.gt.s32.totalorder %v69, 0
    %v71 = vsel %vm70, %v69, 0
    %v72 = vshrl.u32 %v71, 5
    %v73 = vand.u32 %v71, 31
    %v74 = vsub.s32 32, %v73
    %v75 = vshrl.u32 683565275, %v74
    %v76 = vshll.u32 683565275, %v73
    %v77 = vshrl.u32 2475754826, %v74
    %v78 = vor.u32 %v76, %v77
    %v79 = vshll.u32 2475754826, %v73
    %v80 = vshrl.u32 2131351028, %v74
    %v81 = vor.u32 %v79, %v80
    %v82 = vshll.u32 2131351028, %v73
    %v83 = vshrl.u32 2102212464, %v74
    %v84 = vor.u32 %v82, %v83
    %v85 = vshll.u32 2102212464, %v73
    %v86 = vshrl.u32 920167782, %v74
    %v87 = vor.u32 %v85, %v86
    %v88 = vshll.u32 920167782, %v73
    %v89 = vshrl.u32 1326507024, %v74
    %v90 = vor.u32 %v88, %v89
    %vm91 = vcmp.lt.s32.totalorder %v72, 1
    %vm92 = vcmp.lt.s32.totalorder %v72, 2
    %vm93 = vcmp.lt.s32.totalorder %v72, 3
    %vm94 = vcmp.lt.s32.totalorder %v72, 4
    %v95 = vsel %vm91, %v75, %v78
    %v96 = vsel %vm94, %v84, 2102212464
    %v97 = vsel %vm93, %v81, %v96
    %v98 = vsel %vm92, %v95, %v97
    %v99 = vsel %vm91, %v78, %v81
    %v100 = vsel %vm94, %v87, 920167782
    %v101 = vsel %vm93, %v84, %v100
    %v102 = vsel %vm92, %v99, %v101
    %v103 = vsel %vm91, %v81, %v84
    %v104 = vsel %vm94, %v90, 1326507024
    %v105 = vsel %vm93, %v87, %v104
    %v106 = vsel %vm92, %v103, %v105
    %v107 = vshll.u32 %v67, 8
    %v108 = vmul.u32.u64.compose %v107, %v106
    %v109 = vextract.low.u32 %v108
    %v110 = vextract.high.u32 %v108
    %v111 = vmul.u32.u64.compose %v107, %v102
    %v112 = vextract.low.u32 %v111
    %v113 = vextract.high.u32 %v111
    %v114 = vmul.u32 %v107, %v98
    %v115 = vadd.s32 %v110, %v112
    %vm116 = vc.u32 %v110, %v112
    %v117 = vadd.s32 %v113, 1
    %v118 = vsel %vm116, %v117, %v113
    %v119 = vadd.s32 %v114, %v118
    %v120 = vadd.s32 %v119, 536870912
    %v121 = vshrl.u32 %v120, 30
    %v122 = vshll.u32 %v121, 30
    %v123 = vsub.s32 %v119, %v122
    %vm124 = vcmp.lt.s32.totalorder %v123, 0
    %v125 = vsub.s32 0, %v123
    %v126 = vsel %vm124, %v125, %v123
    %v127 = vclz %v126
    %v128 = vsub.s32 %v127, 2
    %vm129 = vcmp.gt.s32.totalorder 0, %v128
    %v130 = vsel %vm129, 0, %v128
    %v131 = vsub.s32 32, %v130
    %v132 = vshll.u32 %v123, %v130
    %v133 = vshrl.u32 %v115, %v131
    %v134 = vor.u32 %v132, %v133
    %v135 = vsub.s32 4294967266, %v130
    %v136 = vadd.s32 %v135, 127
    %v137 = vshll.u32 %v136, 23
    %v138 = vor.u32 4788187, %v137
    %v139 = vand.u32 2147483647, %v138
    %v141 = vcvt.s32.f32 %v134
    %v142 = vmul.f32 %v141, %v139
    %v143 = vxor.u32 %v142, 2147483648
    %v144 = vsel %vm61, %v143, %v142
    %v145 = vsub.s32 4, %v121
    %v146 = vsel %vm61, %v145, %v121
    %v147 = vsel %vm60, %v58, %v144
    %v148 = vsel %vm60, 0, %v146
    %v149 = vcosq.f32.pop %v147
    %v150 = vsinq.f32.pop %v147
    %vm151 = vweird.f32 %v58
    %v152 = vadd.s32 %v148, 3
    %v153 = vand.u32 %v152, 3
    %vm154 = vcmp.lt.s32.totalorder %v153, 2
    %vm155 = vcmp.eq.s32.totalorder %v153, 0
    %v156 = vxor.u32 %v150, 2147483648
    %v157 = vsel %vm155, %v149, %v156
    %vm158 = vcmp.eq.s32.totalorder %v153, 2
    %v159 = vxor.u32 %v149, 2147483648
    %v160 = vsel %vm158, %v159, %v150
    %v161 = vsel %vm154, %v157, %v160
    %v162 = vsel %vm151, nan, %v161
    %v163 = vand.u32 2147483647, %v58
    %vm164 = vcmp.le.f32.partialorder %v163, 0.7853982
    %vm165 = vcmp.lt.s32.totalorder %v58, 0
    %v166 = vand.u32 %v58, 2139095040
    %v167 = vshrl.u32 %v166, 23
    %v168 = vsub.s32 %v167, 127
    %v169 = vand.u32 2147483647, %v58
    %v170 = vand.u32 %v169, 8388607
    %v171 = vor.u32 %v170, 8388608
    %v172 = vsub.s32 0, %v171
    %v173 = vadd.s32 %v168, 1
    %vm174 = vcmp.gt.s32.totalorder %v173, 0
    %v175 = vsel %vm174, %v173, 0
    %v176 = vshrl.u32 %v175, 5
    %v177 = vand.u32 %v175, 31
    %v178 = vsub.s32 32, %v177
    %v179 = vshrl.u32 683565275, %v178
    %v180 = vshll.u32 683565275, %v177
    %v181 = vshrl.u32 2475754826, %v178
    %v182 = vor.u32 %v180, %v181
    %v183 = vshll.u32 2475754826, %v177
    %v184 = vshrl.u32 2131351028, %v178
    %v185 = vor.u32 %v183, %v184
    %v186 = vshll.u32 2131351028, %v177
    %v187 = vshrl.u32 2102212464, %v178
    %v188 = vor.u32 %v186, %v187
    %v189 = vshll.u32 2102212464, %v177
    %v190 = vshrl.u32 920167782, %v178
    %v191 = vor.u32 %v189, %v190
    %v192 = vshll.u32 920167782, %v177
    %v193 = vshrl.u32 1326507024, %v178
    %v194 = vor.u32 %v192, %v193
    %vm195 = vcmp.lt.s32.totalorder %v176, 1
    %vm196 = vcmp.lt.s32.totalorder %v176, 2
    %vm197 = vcmp.lt.s32.totalorder %v176, 3
    %vm198 = vcmp.lt.s32.totalorder %v176, 4
    %v199 = vsel %vm195, %v179, %v182
    %v200 = vsel %vm198, %v188, 2102212464
    %v201 = vsel %vm197, %v185, %v200
    %v202 = vsel %vm196, %v199, %v201
    %v203 = vsel %vm195, %v182, %v185
    %v204 = vsel %vm198, %v191, 920167782
    %v205 = vsel %vm197, %v188, %v204
    %v206 = vsel %vm196, %v203, %v205
    %v207 = vsel %vm195, %v185, %v188
    %v208 = vsel %vm198, %v194, 1326507024
    %v209 = vsel %vm197, %v191, %v208
    %v210 = vsel %vm196, %v207, %v209
    %v211 = vshll.u32 %v171, 8
    %v212 = vmul.u32.u64.compose %v211, %v210
    %v213 = vextract.low.u32 %v212
    %v214 = vextract.high.u32 %v212
    %v215 = vmul.u32.u64.compose %v211, %v206
    %v216 = vextract.low.u32 %v215
    %v217 = vextract.high.u32 %v215
    %v218 = vmul.u32 %v211, %v202
    %v219 = vadd.s32 %v214, %v216
    %vm220 = vc.u32 %v214, %v216
    %v221 = vadd.s32 %v217, 1
    %v222 = vsel %vm220, %v221, %v217
    %v223 = vadd.s32 %v218, %v222
    %v224 = vadd.s32 %v223, 536870912
    %v225 = vshrl.u32 %v224, 30
    %v226 = vshll.u32 %v225, 30
    %v227 = vsub.s32 %v223, %v226
    %vm228 = vcmp.lt.s32.totalorder %v227, 0
    %v229 = vsub.s32 0, %v227
    %v230 = vsel %vm228, %v229, %v227
    %v231 = vclz %v230
    %v232 = vsub.s32 %v231, 2
    %vm233 = vcmp.gt.s32.totalorder 0, %v232
    %v234 = vsel %vm233, 0, %v232
    %v235 = vsub.s32 32, %v234
    %v236 = vshll.u32 %v227, %v234
    %v237 = vshrl.u32 %v219, %v235
    %v238 = vor.u32 %v236, %v237
    %v239 = vsub.s32 4294967266, %v234
    %v240 = vadd.s32 %v239, 127
    %v241 = vshll.u32 %v240, 23
    %v242 = vor.u32 4788187, %v241
    %v243 = vand.u32 2147483647, %v242
    %v245 = vcvt.s32.f32 %v238
    %v246 = vmul.f32 %v245, %v243
    %v247 = vxor.u32 %v246, 2147483648
    %v248 = vsel %vm165, %v247, %v246
    %v249 = vsub.s32 4, %v225
    %v250 = vsel %vm165, %v249, %v225
    %v251 = vsel %vm164, %v58, %v248
    %v252 = vsel %vm164, 0, %v250
    %v253 = vcosq.f32.pop %v251
    %v254 = vsinq.f32.pop %v251
    %vm255 = vweird.f32 %v58
    %v256 = vand.u32 %v252, 3
    %vm257 = vcmp.lt.s32.totalorder %v256, 2
    %vm258 = vcmp.eq.s32.totalorder %v256, 0
    %v259 = vxor.u32 %v254, 2147483648
    %v260 = vsel %vm258, %v253, %v259
    %vm261 = vcmp.eq.s32.totalorder %v256, 2
    %v262 = vxor.u32 %v253, 2147483648
    %v263 = vsel %vm261, %v262, %v254
    %v264 = vsel %vm257, %v260, %v263
    %v265 = vsel %vm255, nan, %v264
    %267 = vrot.lane.b32.xlu0 %v162, 4
    %v268 = vpop.permute.xlu0 %267
    %271 = vrot.lane.b32.xlu0 %v265, 68
    %v272 = vpop.permute.xlu0 %271
    %vm274 = vcmask 31744
    %v275 = vsel %vm274, %v12, %v268
    %vm276 = vcmask 556032
    %v277 = vsel %vm276, %v275, %v272
    %278 = vst [vmem:[#allocation2] sm:$0xff] %v277
    %279 = vst.msk [vmem:[#allocation2 + $0x8] sm:$0xff] %vm274, %v272
    // Predicated region
    $region10: #{tpu_custom_call.1} parent=1 // pred_check
      _
    $region11: #{tpu_custom_call.1} parent=1 // pred_check_branch
      %281 = sbr.rel (0) target = $region13
    $region12: #{tpu_custom_call.1} parent=1 // pred_region
      %s283 = ssub.s32 256, 256
      %284 = vsyncadd [#allocation3], %s283
      %s286 = sshll.u32 [#allocation2], 4
      %s287 = int_to_ptr.vmem [resolvable:$true] %s286
      %289 = dma.vmem_to_hbm [thread:$0]  %s287, 256, %s2, [#allocation3]
    $region13: #{tpu_custom_call.1} parent=1 // pred_fallthru
      _
    // Predicated region
    $region14: #{tpu_custom_call.1} parent=1 // pred_check
      _
    $region15: #{tpu_custom_call.1} parent=1 // pred_check_branch
      %291 = sbr.rel (0) target = $region17
    $region16: #{tpu_custom_call.1} parent=1 // pred_region
      %292 = dma.done [#allocation3], 256
    $region17: #{tpu_custom_call.1} parent=1 // pred_fallthru
      _
    %293 = vsyncpa [#allocation3], 1

</llo_original>
